<compile_context>
chip_gen: v7x
topology: tpu7x:2x2x1
jax: 0.10.0
libtpu: 0.0.40
codegen_flags: <defaults>
</compile_context>

<pallas_src>
import jax
import jax.numpy as jnp
from jax.experimental import pallas as pl
from jax.experimental.pallas import tpu as pltpu

EPS = 1e-5  # PyTorch BatchNorm1d default eps


def _csp_bn_kernel(x_ref, wt_ref, bn_ref, o_ref, gram_acc):
    """Grid = (B_tiles, T_tiles); T is the inner (reduction) axis.

    x_ref:    (Bt, C, Tt)   input tile (f32 or bf16; MXU accumulates f32)
    wt_ref:   (C, F)        CSP filters, transposed, f32
    bn_ref:   (2, F)        row 0: gamma*rsqrt(var+eps)/T   row 1: beta - mean*scale
    o_ref:    (Bt, F)       output tile (written once, at the last T step)
    gram_acc: (Bt, C, C)    f32 running sum_t x[b,c,t]*x[b,d,t]
    """
    t = pl.program_id(1)

    @pl.when(t == 0)
    def _():
        gram_acc[...] = jnp.zeros_like(gram_acc)

    x = x_ref[...]
    # Per-batch Gram matrix over this time tile. The contraction runs over
    # T_tile (>=128), keeping the MXU fed, and avoids any (B, F, T) intermediate.
    gram_acc[...] += jnp.einsum(
        "bct,bdt->bcd", x, x, preferred_element_type=jnp.float32)

    @pl.when(t == pl.num_programs(1) - 1)
    def _():
        bt, c, _ = gram_acc.shape
        f = wt_ref.shape[1]
        g = gram_acc[...]                                       # (Bt, C, C) f32
        wt = jnp.broadcast_to(wt_ref[...][None, :, :], (bt, c, f))
        # power_sum[b,f] = sum_{c,d} W[f,c] * G[b,c,d] * W[f,d]
        h = jnp.einsum("bcd,bdf->bcf", g, wt,
                       preferred_element_type=jnp.float32)      # (Bt, C, F)
        power_sum = jnp.sum(h * wt, axis=1)                     # (Bt, F)
        # Eval-mode BatchNorm1d with scale/shift (and the 1/T of the time mean)
        # folded in the wrapper -> single FMA.
        scale = bn_ref[0:1, :]                                  # (1, F)
        shift = bn_ref[1:2, :]                                  # (1, F)
        o_ref[...] = (power_sum * scale + shift).astype(o_ref.dtype)


def _pick_batch_tile(B):
    # Block dims (other than the last two) are unconstrained, but the output's
    # second-to-last dim is B_tile, so keep it == B (small B) or a multiple of 8.
    if B <= 8:
        return B
    for bt in (8, 16, 24, 32):
        if B % bt == 0:
            return bt
    return B


def _pick_time_tile(T, b_tile, C, itemsize, max_tile_bytes=8 << 20):
    """Largest multiple of 128 dividing T whose x tile fits the per-buffer budget
    (sized so a double-buffered pipeline stays well inside v7x's 64 MiB VMEM)."""
    if T % 128 != 0:
        return T  # block last dim must be a multiple of 128 or the full dim
    cap_elems = max(max_tile_bytes // max(b_tile * C * itemsize, 1), 128)
    cap = max((cap_elems // 128) * 128, 128)
    for tt in range(min(cap, T), 0, -128):
        if T % tt == 0:
            return tt
    return T


def csp_bn(x, filters, running_mean, running_var, gamma, beta, time_tile=None):
    """CSP (average_power) -> BatchNorm1d (eval mode) in one Pallas TPU kernel.

    x: (B, C, T) float32 or bfloat16 (bf16 halves HBM traffic; accumulation is f32).
    filters: (F, C).  running_mean/var, gamma, beta: (F,).  Returns (B, F) float32.
    """
    B, C, T = x.shape
    F = filters.shape[0]

    # Fold BN (running stats) into one scale/shift pair; fold the 1/T of the
    # time mean into the scale so the kernel epilogue is a single FMA.
    inv_std = jax.lax.rsqrt(running_var.astype(jnp.float32) + EPS)
    scale = gamma.astype(jnp.float32) * inv_std
    shift = beta.astype(jnp.float32) - running_mean.astype(jnp.float32) * scale
    bn_params = jnp.stack([scale / jnp.float32(T), shift], axis=0)   # (2, F)

    wt = filters.astype(jnp.float32).T                               # (C, F)

    b_tile = _pick_batch_tile(B)
    if time_tile is None:
        time_tile = _pick_time_tile(T, b_tile, C, x.dtype.itemsize)
    assert T % time_tile == 0 and (time_tile % 128 == 0 or time_tile == T)
    grid = (B // b_tile, T // time_tile)

    flops = 2 * B * C * C * T + 2 * B * C * C * F
    bytes_accessed = (x.size * x.dtype.itemsize + wt.size * 4
                      + bn_params.size * 4 + B * F * 4)

    return pl.pallas_call(
        _csp_bn_kernel,
        out_shape=jax.ShapeDtypeStruct((B, F), jnp.float32),
        grid_spec=pltpu.PrefetchScalarGridSpec(
            num_scalar_prefetch=0,
            grid=grid,
            in_specs=[
                pl.BlockSpec((b_tile, C, time_tile), lambda b, t: (b, 0, t)),
                pl.BlockSpec((C, F), lambda b, t: (0, 0)),
                pl.BlockSpec((2, F), lambda b, t: (0, 0)),
            ],
            out_specs=pl.BlockSpec((b_tile, F), lambda b, t: (b, 0)),
            scratch_shapes=[pltpu.VMEM((b_tile, C, C), jnp.float32)],
        ),
        compiler_params=pltpu.CompilerParams(
            dimension_semantics=("parallel", "arbitrary"),
            vmem_limit_bytes=32 * 1024 * 1024,
        ),
        cost_estimate=pl.CostEstimate(
            flops=flops, transcendentals=0, bytes_accessed=bytes_accessed),
    )(x, wt, bn_params)


def csp_bn_reference(x, filters, running_mean, running_var, gamma, beta):
    # Pure-JAX reference matching the PyTorch forward (eval-mode BN).
    y = jnp.einsum("fc,bct->bft", filters, x.astype(jnp.float32))
    power = jnp.mean(jnp.square(y), axis=2)
    return ((power - running_mean[None, :])
            / jnp.sqrt(running_var[None, :] + EPS) * gamma[None, :]
            + beta[None, :])


if __name__ == "__main__":
    # Small deterministic example: batch=2, channels=8, time=256, csp filters=8.
    B, C, T, F = 2, 8, 256, 8

    key = jax.random.PRNGKey(0)
    kx, kf, km, kv = jax.random.split(key, 4)

    x = jax.random.normal(kx, (B, C, T), dtype=jnp.float32)
    filters = jax.random.normal(kf, (F, C), dtype=jnp.float32) * 0.5
    running_mean = jax.random.normal(km, (F,), dtype=jnp.float32) * 0.1
    running_var = jnp.abs(jax.random.normal(kv, (F,), dtype=jnp.float32)) + 1.0
    gamma = jnp.ones((F,), dtype=jnp.float32)   # PyTorch BN weight init
    beta = jnp.zeros((F,), dtype=jnp.float32)   # PyTorch BN bias init

    # time_tile=128 forces a 2-step T grid so the accumulator path is exercised.
    out = csp_bn(x, filters, running_mean, running_var, gamma, beta, time_tile=128)
    out = jax.block_until_ready(out)

    ref = csp_bn_reference(x, filters, running_mean, running_var, gamma, beta)
    assert out.shape == (B, F)
    assert jnp.allclose(out, ref, atol=1e-3, rtol=1e-3), "mismatch vs reference"

    print("KERNEL_OK")
</pallas_src>

<mosaic_0001>
module attributes {stable_mosaic.version = 11 : i64} {
  func.func @_csp_bn_kernel(%arg0: i32, %arg1: i32, %arg2: memref<2x8x128xf32, #tpu.memory_space<vmem>>, %arg3: memref<8x8xf32, #tpu.memory_space<vmem>>, %arg4: memref<2x8xf32, #tpu.memory_space<vmem>>, %arg5: memref<2x8xf32, #tpu.memory_space<vmem>>, %arg6: memref<2x8x8xf32, #tpu.memory_space<vmem>>) attributes {dimension_semantics = [#tpu.dimension_semantics<parallel>, #tpu.dimension_semantics<arbitrary>], iteration_bounds = array<i64: 1, 2>, scalar_prefetch = 0 : i64, scratch_operands = 1 : i64, tpu.core_type = #tpu.core_type<tc>, window_params = [{transform_indices = @transform_0, window_bounds = array<i64: 2, 8, 128>}, {pipeline_mode = #tpu.pipeline_mode<synchronous>, transform_indices = @transform_1, window_bounds = array<i64: 8, 8>}, {pipeline_mode = #tpu.pipeline_mode<synchronous>, transform_indices = @transform_2, window_bounds = array<i64: 2, 8>}, {transform_indices = @transform_3, window_bounds = array<i64: 2, 8>}]} {
    %c0_i32 = arith.constant 0 : i32
    %0 = arith.cmpi eq, %arg1, %c0_i32 : i32
    %1 = arith.extui %0 : i1 to i32
    %c0_i32_0 = arith.constant 0 : i32
    %2 = arith.cmpi ne, %1, %c0_i32_0 : i32
    scf.if %2 {
      %cst_10 = arith.constant 0.000000e+00 : f32
      %11 = vector.broadcast %cst_10 : f32 to vector<2x8x8xf32>
      %c0_11 = arith.constant 0 : index
      %c0_12 = arith.constant 0 : index
      %c0_13 = arith.constant 0 : index
      %12 = vector.load %arg6[%c0_11, %c0_12, %c0_13] : memref<2x8x8xf32, #tpu.memory_space<vmem>>, vector<2x8x8xf32>
      tpu.vector_store %arg6[%c0_11, %c0_12, %c0_13], %11 {strides = array<i32>} : memref<2x8x8xf32, #tpu.memory_space<vmem>>, vector<2x8x8xf32>,
    } else {
    }
    %c0 = arith.constant 0 : index
    %c0_1 = arith.constant 0 : index
    %c0_2 = arith.constant 0 : index
    %3 = vector.load %arg2[%c0, %c0_1, %c0_2] : memref<2x8x128xf32, #tpu.memory_space<vmem>>, vector<2x8x128xf32>
    %c0_3 = arith.constant 0 : index
    %c0_4 = arith.constant 0 : index
    %c0_5 = arith.constant 0 : index
    %4 = vector.load %arg6[%c0_3, %c0_4, %c0_5] : memref<2x8x8xf32, #tpu.memory_space<vmem>>, vector<2x8x8xf32>
    "tpu.trace_start"() <{level = 10 : i32, message = "bct,bdt->bcd"}> : () -> ()
    %cst = arith.constant dense<0.000000e+00> : vector<2x8x8xf32>
    %5 = tpu.matmul %3, %3, %cst {dimension_numbers = #tpu.dot_dimension_numbers<[2], [2], [1], [1], [0, 0, 0, 1, 1, 1], [0], [0]>} : vector<2x8x128xf32>, vector<2x8x128xf32>, vector<2x8x8xf32> -> vector<2x8x8xf32>
    "tpu.trace_stop"() : () -> ()
    %6 = arith.addf %4, %5 : vector<2x8x8xf32>
    %c0_6 = arith.constant 0 : index
    %c0_7 = arith.constant 0 : index
    %c0_8 = arith.constant 0 : index
    %7 = vector.load %arg6[%c0_6, %c0_7, %c0_8] : memref<2x8x8xf32, #tpu.memory_space<vmem>>, vector<2x8x8xf32>
    tpu.vector_store %arg6[%c0_6, %c0_7, %c0_8], %6 {strides = array<i32>} : memref<2x8x8xf32, #tpu.memory_space<vmem>>, vector<2x8x8xf32>,
    %c1_i32 = arith.constant 1 : i32
    %8 = arith.cmpi eq, %arg1, %c1_i32 : i32
    %9 = arith.extui %8 : i1 to i32
    %c0_i32_9 = arith.constant 0 : i32
    %10 = arith.cmpi ne, %9, %c0_i32_9 : i32
    scf.if %10 {
      %c0_10 = arith.constant 0 : index
      %c0_11 = arith.constant 0 : index
      %c0_12 = arith.constant 0 : index
      %11 = vector.load %arg6[%c0_10, %c0_11, %c0_12] : memref<2x8x8xf32, #tpu.memory_space<vmem>>, vector<2x8x8xf32>
      %c0_13 = arith.constant 0 : index
      %c0_14 = arith.constant 0 : index
      %12 = vector.load %arg3[%c0_13, %c0_14] : memref<8x8xf32, #tpu.memory_space<vmem>>, vector<8x8xf32>
      %13 = vector.shape_cast %12 : vector<8x8xf32> to vector<1x8x8xf32>
      %14 = vector.shape_cast %13 : vector<1x8x8xf32> to vector<1x8x8xf32>
      %15 = vector.broadcast %14 : vector<1x8x8xf32> to vector<2x8x8xf32>
      "tpu.trace_start"() <{level = 10 : i32, message = "bcd,bdf->bcf"}> : () -> ()
      %cst_15 = arith.constant dense<0.000000e+00> : vector<2x8x8xf32>
      %16 = tpu.matmul %11, %15, %cst_15 {dimension_numbers = #tpu.dot_dimension_numbers<[2], [1], [1], [2], [0, 0, 0, 1, 1, 2], [0], [0]>} : vector<2x8x8xf32>, vector<2x8x8xf32>, vector<2x8x8xf32> -> vector<2x8x8xf32>
      "tpu.trace_stop"() : () -> ()
      %17 = arith.mulf %16, %15 : vector<2x8x8xf32>
      %cst_16 = arith.constant dense<0.000000e+00> : vector<2x8xf32>
      %18 = vector.multi_reduction <add>, %17, %cst_16 [1] : vector<2x8x8xf32> to vector<2x8xf32>
      %c0_17 = arith.constant 0 : index
      %c0_18 = arith.constant 0 : index
      %19 = vector.load %arg4[%c0_17, %c0_18] : memref<2x8xf32, #tpu.memory_space<vmem>>, vector<1x8xf32>
      %c1 = arith.constant 1 : index
      %c0_19 = arith.constant 0 : index
      %20 = vector.load %arg4[%c1, %c0_19] : memref<2x8xf32, #tpu.memory_space<vmem>>, vector<1x8xf32>
      %21 = vector.broadcast %19 : vector<1x8xf32> to vector<2x8xf32>
      %22 = arith.mulf %18, %21 : vector<2x8xf32>
      %23 = vector.broadcast %20 : vector<1x8xf32> to vector<2x8xf32>
      %24 = arith.addf %22, %23 : vector<2x8xf32>
      %c0_20 = arith.constant 0 : index
      %c0_21 = arith.constant 0 : index
      %25 = vector.load %arg5[%c0_20, %c0_21] : memref<2x8xf32, #tpu.memory_space<vmem>>, vector<2x8xf32>
      tpu.vector_store %arg5[%c0_20, %c0_21], %24 {strides = array<i32>} : memref<2x8xf32, #tpu.memory_space<vmem>>, vector<2x8xf32>,
    } else {
    }
    return
  }
  func.func @transform_0(%arg0: i32, %arg1: i32) -> (i32, i32, i32) {
    %c0_i32 = arith.constant 0 : i32
    %c0_i32_0 = arith.constant 0 : i32
    return %arg0, %c0_i32, %arg1 : i32, i32, i32
  }
  func.func @transform_1(%arg0: i32, %arg1: i32) -> (i32, i32) {
    %c0_i32 = arith.constant 0 : i32
    %c0_i32_0 = arith.constant 0 : i32
    %c0_i32_1 = arith.constant 0 : i32
    return %c0_i32, %c0_i32_0 : i32, i32
  }
  func.func @transform_2(%arg0: i32, %arg1: i32) -> (i32, i32) {
    %c0_i32 = arith.constant 0 : i32
    %c0_i32_0 = arith.constant 0 : i32
    %c0_i32_1 = arith.constant 0 : i32
    return %c0_i32, %c0_i32_0 : i32, i32
  }
  func.func @transform_3(%arg0: i32, %arg1: i32) -> (i32, i32) {
    %c0_i32 = arith.constant 0 : i32
    %c0_i32_0 = arith.constant 0 : i32
    return %arg0, %c0_i32 : i32, i32
  }
}

</mosaic_0001>

<llo_original>
// kernel: tpu_custom_call.1
$region0: #{tpu_custom_call.1}
  #allocation0 [shape = 'u32[]', space=smem, size = 0x4, offset = 0x4, fixed_abs, tag = 'smem constant byte address 0x4 - core index']
  #allocation1 [shape = 'u32[144,128]{1,0:T(1,128)}', space=vmem, size = 0x12000, scoped, tag = 'internal scratch']
  #allocation2 [shape = 'f32[2,8,8]{2,1,0:T(8,128)}', space=vmem, size = 0x2000, scoped, tag = 'scratch operand']
  %s0 = inlined_call_operand.hbm [shape: f32[2,8,256], index: 0, kind: input, shape index: {}]
  %s1 = inlined_call_operand.hbm [shape: f32[8,8], index: 1, kind: input, shape index: {}]
  %s2 = inlined_call_operand.vmem [shape: f32[2,8], index: 2, kind: input, shape index: {}]
  %s3 = inlined_call_operand.hbm [shape: f32[2,8], index: 3, kind: output, shape index: {}]
  %s4 = sld [smem:[#allocation0]]
  $region61: #{tpu_custom_call.1} parent=0
    _
  %s6 = ssub.s32 1, %s4
  %s7 = scalar_select 0, %s6, %s4
  $region1: #{tpu_custom_call.1} parent=0
    #allocation3 [shape = 'u8[16384]{0}', space=vmem, size = 0x4000, scoped, tag = 'input window, operand 0']
    #allocation4 [shape = 's32[2]{0}', space=sflag, size = 0x8, scoped, tag = 'scoped memory for tpu_custom_call.1']
    #allocation5 [shape = 's32[2]{0}', space=sflag, size = 0x8, scoped, tag = 'scoped memory for tpu_custom_call.1']
    #allocation6 [shape = 'u8[4096]{0}', space=vmem, size = 0x1000, scoped, tag = 'input window, operand 1, single buffered']
    #allocation7 [shape = 's32[1]{0}', space=sflag, size = 0x4, scoped, tag = 'scoped memory for tpu_custom_call.1']
    #allocation8 [shape = 'u8[1024]{0}', space=vmem, size = 0x400, scoped, tag = 'output window, operand 0, single buffered']
    %8 = vsyncpa [#allocation4], 0
    %s9 = scalar_lea.sflag [#allocation4], 1
    %10 = vsyncpa %s9, 0
    %11 = vsyncpa [#allocation7], 0
    %12 = vsyncpa [#allocation5], 0
    loop: start=0, step=1, limit=4
    $region2: #{tpu_custom_call.1} parent=1 // loop_pre_header
      _
    $region3: #{tpu_custom_call.1} parent=1 // loop_header
      %s14 = sphi 0, %s18
      %p15 = scmp.ge.s32.totalorder %s14, 4
      %s21 = sphi 0, %s33
      %s22 = sphi 0, %s29
      %s23 = sphi 0, %s21
      %s24 = sphi 0, %s22
      %s25 = sphi 0, %s23
      %s26 = sphi 0, %s24
      %s38 = sphi 0, %s40
      %s41 = sphi 0, %s38
      %s42 = sphi 0, %s41
      %s58 = sphi 0, %s42
      %s62 = sphi 0, %s62
      %s64 = sphi 0, %s62
      %s65 = sphi 0, %s64
      %s79 = sphi 0, %s65
      %s83 = sphi 0, %s83
      %s85 = sphi 0, %s83
      %s86 = sphi 0, %s85
      %s100 = sphi 0, %s86
      %s106 = sphi 0, %s108
      %s109 = sphi 0, %s106
      %s110 = sphi 0, %s109
      %s126 = sphi 0, %s110
    $region4: #{tpu_custom_call.1} parent=1 // loop_header_branch
      %17 = sbr.rel (%p15) target = $region8
    $region5: #{tpu_custom_call.1} parent=1 // loop_body
      %s19 = ssub.s32 %s14, 1
      %s20 = ssub.s32 %s14, 2
      %s27 = sadd.s32 1, %s22
      %p28 = scmp.ge.s32.totalorder %s27, 2
      %s29 = scalar_select %p28, 0, %s27
      %s30 = sadd.s32 1, %s21
      %s31 = scalar_select %p28, %s30, %s21
      %p32 = scmp.ge.s32.totalorder %s31, 1
      %s33 = scalar_select %p32, 0, %s31
      %s34 = ssub.s32 %s21, %s33
      %s35 = ssub.s32 %s22, %s29
      %s36 = sor.u32 %s34, %s35
      %p37 = scmp.eq.s32.totalorder %s36, 0
      %s39 = sadd.s32 %s38, 1
      %s40 = scalar_select %p37, %s38, %s39
      %p43 = pneg %p37
      %p44 = scmp.eq.s32.totalorder %s14, 1
      %p45 = por %p43, %p44
      %p46 = scmp.ne.s32.totalorder %s38, %s41
      %p47 = scmp.eq.s32.totalorder %s14, 0
      %p48 = por %p46, %p47
      %p49 = scmp.ne.s32.totalorder %s38, %s41
      %p50 = scmp.eq.s32.totalorder %s19, 1
      %p51 = por %p49, %p50
      %p52 = scmp.ne.s32.totalorder %s41, %s42
      %p53 = scmp.eq.s32.totalorder %s19, 0
      %p54 = por %p52, %p53
      %p55 = scmp.ne.s32.totalorder %s41, %s42
      %p56 = scmp.eq.s32.totalorder %s20, 1
      %p57 = por %p55, %p56
      %p59 = scmp.ne.s32.totalorder %s42, %s58
      %p60 = scmp.eq.s32.totalorder %s20, 0
      %p61 = por %p59, %p60
      %s63 = sadd.s32 %s62, 1
      %p66 = scmp.eq.s32.totalorder %s14, 1
      %p67 = scmp.ne.s32.totalorder %s62, %s64
      %p68 = scmp.eq.s32.totalorder %s14, 0
      %p69 = por %p67, %p68
      %p70 = scmp.ne.s32.totalorder %s62, %s64
      %p71 = scmp.eq.s32.totalorder %s19, 1
      %p72 = por %p70, %p71
      %p73 = scmp.ne.s32.totalorder %s64, %s65
      %p74 = scmp.eq.s32.totalorder %s19, 0
      %p75 = por %p73, %p74
      %p76 = scmp.ne.s32.totalorder %s64, %s65
      %p77 = scmp.eq.s32.totalorder %s20, 1
      %p78 = por %p76, %p77
      %p80 = scmp.ne.s32.totalorder %s65, %s79
      %p81 = scmp.eq.s32.totalorder %s20, 0
      %p82 = por %p80, %p81
      %s84 = sadd.s32 %s83, 1
      %p87 = scmp.eq.s32.totalorder %s14, 1
      %p88 = scmp.ne.s32.totalorder %s83, %s85
      %p89 = scmp.eq.s32.totalorder %s14, 0
      %p90 = por %p88, %p89
      %p91 = scmp.ne.s32.totalorder %s83, %s85
      %p92 = scmp.eq.s32.totalorder %s19, 1
      %p93 = por %p91, %p92
      %p94 = scmp.ne.s32.totalorder %s85, %s86
      %p95 = scmp.eq.s32.totalorder %s19, 0
      %p96 = por %p94, %p95
      %p97 = scmp.ne.s32.totalorder %s85, %s86
      %p98 = scmp.eq.s32.totalorder %s20, 1
      %p99 = por %p97, %p98
      %p101 = scmp.ne.s32.totalorder %s86, %s100
      %p102 = scmp.eq.s32.totalorder %s20, 0
      %p103 = por %p101, %p102
      %s104 = ssub.s32 %s21, %s33
      %p105 = scmp.eq.s32.totalorder %s104, 0
      %s107 = sadd.s32 %s106, 1
      %s108 = scalar_select %p105, %s106, %s107
      %p111 = pneg %p105
      %p112 = scmp.eq.s32.totalorder %s14, 1
      %p113 = por %p111, %p112
      %p114 = scmp.ne.s32.totalorder %s106, %s109
      %p115 = scmp.eq.s32.totalorder %s14, 0
      %p116 = por %p114, %p115
      %p117 = scmp.ne.s32.totalorder %s106, %s109
      %p118 = scmp.eq.s32.totalorder %s19, 1
      %p119 = por %p117, %p118
      %p120 = scmp.ne.s32.totalorder %s109, %s110
      %p121 = scmp.eq.s32.totalorder %s19, 0
      %p122 = por %p120, %p121
      %p123 = scmp.ne.s32.totalorder %s109, %s110
      %p124 = scmp.eq.s32.totalorder %s20, 1
      %p125 = por %p123, %p124
      %p127 = scmp.ne.s32.totalorder %s110, %s126
      %p128 = scmp.eq.s32.totalorder %s20, 0
      %p129 = por %p127, %p128
      %p130 = scmp.le.s32.totalorder 1, %s14
      %p131 = scmp.lt.s32.totalorder %s14, 3
      %p132 = pnand %p130, %p131
      %p133 = pneg %p132
      // Predicated region
      $region9: #{tpu_custom_call.1} parent=5 // pred_check
        _
      $region10: #{tpu_custom_call.1} parent=5 // pred_check_branch
        %135 = sbr.rel (%p132) target = $region12
      $region11: #{tpu_custom_call.1} parent=5 // pred_region
        %s136 = ssub.s32 %s14, 1
        // Predicated region
        $region13: #{tpu_custom_call.1} parent=11 // pred_check
          %p137 = pneg %p75
        $region14: #{tpu_custom_call.1} parent=11 // pred_check_branch
          %139 = sbr.rel (%p137) target = $region16
        $region15: #{tpu_custom_call.1} parent=11 // pred_region
          %s141 = ssub.s32 128, 128
          %142 = vsyncadd [#allocation7], %s141
          %s144 = sshll.u32 [#allocation6], 4
          %s145 = int_to_ptr.vmem [resolvable:$true] %s144
          %147 = dma.hbm_to_vmem [thread:$0]  %s1, 128, %s145, [#allocation7]
        $region16: #{tpu_custom_call.1} parent=11 // pred_fallthru
          _
        // Predicated region
        $region17: #{tpu_custom_call.1} parent=11 // pred_check
          %p148 = pneg %p96
        $region18: #{tpu_custom_call.1} parent=11 // pred_check_branch
          %150 = sbr.rel (%p148) target = $region20
        $region19: #{tpu_custom_call.1} parent=11 // pred_region
          _
        $region20: #{tpu_custom_call.1} parent=11 // pred_fallthru
          _
      $region12: #{tpu_custom_call.1} parent=5 // pred_fallthru
        _
      %p151 = scmp.lt.s32.totalorder %s14, 2
      // Predicated region
      $region21: #{tpu_custom_call.1} parent=5 // pred_check
        %p152 = pneg %p151
      $region22: #{tpu_custom_call.1} parent=5 // pred_check_branch
        %154 = sbr.rel (%p152) target = $region24
      $region23: #{tpu_custom_call.1} parent=5 // pred_region
        // Predicated region
        $region25: #{tpu_custom_call.1} parent=23 // pred_check
          %p155 = pneg %p48
        $region26: #{tpu_custom_call.1} parent=23 // pred_check_branch
          %157 = sbr.rel (%p155) target = $region28
        $region27: #{tpu_custom_call.1} parent=23 // pred_region
          %s158 = sand.u32 %s38, 1
          %s159 = scalar_lea.sflag [#allocation4], %s158
          %s160 = sand.u32 %s38, 1
          %s161 = smul.addr %s160, 16
          %s162 = scalar_lea.vmem [#allocation3], %s161
          %s163 = smul.u32 2, %s21
          %s165 = ssub.s32 256, 256
          %166 = vsyncadd %s159, %s165
          %s167 = smul.addr %s163, 2
          %s168 = sadd.s32 %s22, %s167
          %s169 = smul.addr %s168, 128
          %s170 = scalar_lea.hbm %s0, %s169
          %s171 = sshll.u32 %s162, 4
          %s172 = int_to_ptr.vmem [resolvable:$true] %s171
          %177 = dma.hbm_to_vmem [thread:$0]  %s170, 256, %s172, %s159, 256, 128, 8
        $region28: #{tpu_custom_call.1} parent=23 // pred_fallthru
          _
      $region24: #{tpu_custom_call.1} parent=5 // pred_fallthru
        _
      %p178 = scmp.le.s32.totalorder 1, %s14
      %p179 = scmp.lt.s32.totalorder %s14, 3
      %p180 = pnand %p178, %p179
      %p181 = pneg %p180
      // Predicated region
      $region29: #{tpu_custom_call.1} parent=5 // pred_check
        _
      $region30: #{tpu_custom_call.1} parent=5 // pred_check_branch
        %183 = sbr.rel (%p180) target = $region32
      $region31: #{tpu_custom_call.1} parent=5 // pred_region
        %s184 = ssub.s32 %s14, 1
        %s185 = sand.u32 %s41, 1
        %s186 = scalar_lea.sflag [#allocation4], %s185
        %s187 = sand.u32 %s41, 1
        %s188 = smul.addr %s187, 16
        %s189 = scalar_lea.vmem [#allocation3], %s188
        // Predicated region
        $region33: #{tpu_custom_call.1} parent=31 // pred_check
          %p190 = pneg %p54
        $region34: #{tpu_custom_call.1} parent=31 // pred_check_branch
          %192 = sbr.rel (%p190) target = $region36
        $region35: #{tpu_custom_call.1} parent=31 // pred_region
          %193 = dma.done %s186, 256
        $region36: #{tpu_custom_call.1} parent=31 // pred_fallthru
          _
        // Predicated region
        $region37: #{tpu_custom_call.1} parent=31 // pred_check
          %p194 = pneg %p75
        $region38: #{tpu_custom_call.1} parent=31 // pred_check_branch
          %196 = sbr.rel (%p194) target = $region40
        $region39: #{tpu_custom_call.1} parent=31 // pred_region
          %197 = dma.done [#allocation7], 128
        $region40: #{tpu_custom_call.1} parent=31 // pred_fallthru
          _
        %s198 = sand.u32 %s41, 1
        %s199 = scalar_lea.sflag [#allocation4], %s198
        %s200 = sand.u32 %s41, 1
        %s201 = smul.addr %s200, 16
        %s202 = scalar_lea.vmem [#allocation3], %s201
        %p203 = pneg %p54
        %p204 = pneg %p51
        %p205 = pneg %p75
        %p206 = pneg %p72
        %p207 = pneg %p96
        %p208 = pneg %p93
        %p209 = pneg %p122
        %p210 = pneg %p119
        %s211 = smul.u32 2, %s23
        %p212 = scmp.eq.s32.totalorder %s24, 0
        // Predicated region
        $region41: #{tpu_custom_call.1} parent=31 // pred_check
          %p213 = pneg %p212
        $region42: #{tpu_custom_call.1} parent=31 // pred_check_branch
          %215 = sbr.rel (%p213) target = $region44
        $region43: #{tpu_custom_call.1} parent=31 // pred_region
          %vm216 = vcmask 64512
          %217 = vst.msk [vmem:[#allocation2] sm:$0xff] %vm216, 0.0
          %218 = vst.msk [vmem:[#allocation2 + $0x8] sm:$0xff] %vm216, 0.0
        $region44: #{tpu_custom_call.1} parent=31 // pred_fallthru
          _
        %v219 = vld [vmem:[%s189] sm:$0xff]
        %v220 = vld [vmem:[%s189 + $0x8] sm:$0xff]
        %v221 = vld [vmem:[#allocation2] sm:$0xff]
        %v222 = vld [vmem:[#allocation2 + $0x8] sm:$0xff]
        %223 = vmatprep.subr.mxu0 0.0
        %224 = vmatpush1.xpose.msra.mxu0 %v219
        %225 = vmatprep.subr.mxu0 0.0
        %226 = vmatpush1.xpose.msra.mxu0 0.0
        %227 = vmatprep.subr.mxu0 0.0
        %228 = vmatpush1.xpose.msra.mxu0 0.0
        %229 = vmatprep.subr.mxu0 0.0
        %230 = vmatpush1.xpose.msra.mxu0 0.0
        %231 = vmatprep.subr.mxu0 0.0
        %232 = vmatpush1.xpose.msra.mxu0 0.0
        %233 = vmatprep.subr.mxu0 0.0
        %234 = vmatpush1.xpose.msra.mxu0 0.0
        %235 = vmatprep.subr.mxu0 0.0
        %236 = vmatpush1.xpose.msra.mxu0 0.0
        %237 = vmatprep.subr.mxu0 0.0
        %238 = vmatpush1.xpose.msra.mxu0 0.0
        %239 = vmatprep.subr.mxu0 0.0
        %240 = vmatpush1.xpose.msra.mxu0 0.0
        %241 = vmatprep.subr.mxu0 0.0
        %242 = vmatpush1.xpose.msra.mxu0 0.0
        %243 = vmatprep.subr.mxu0 0.0
        %244 = vmatpush1.xpose.msra.mxu0 0.0
        %245 = vmatprep.subr.mxu0 0.0
        %246 = vmatpush1.xpose.msra.mxu0 0.0
        %247 = vmatprep.subr.mxu0 0.0
        %248 = vmatpush1.xpose.msra.mxu0 0.0
        %249 = vmatprep.subr.mxu0 0.0
        %250 = vmatpush1.xpose.msra.mxu0 0.0
        %251 = vmatprep.subr.mxu0 0.0
        %252 = vmatpush1.xpose.msra.mxu0 0.0
        %253 = vmatprep.subr.mxu0 0.0
        %254 = vmatpush1.xpose.msra.mxu0 0.0
        %255 = vmatprep.subr.mxu0 0.0
        %256 = vmatpush1.xpose.msra.mxu0 0.0
        %257 = vmatprep.subr.mxu0 0.0
        %258 = vmatpush1.xpose.msra.mxu0 0.0
        %259 = vmatprep.subr.mxu0 0.0
        %260 = vmatpush1.xpose.msra.mxu0 0.0
        %261 = vmatprep.subr.mxu0 0.0
        %262 = vmatpush1.xpose.msra.mxu0 0.0
        %263 = vmatprep.subr.mxu0 0.0
        %264 = vmatpush1.xpose.msra.mxu0 0.0
        %265 = vmatprep.subr.mxu0 0.0
        %266 = vmatpush1.xpose.msra.mxu0 0.0
        %267 = vmatprep.subr.mxu0 0.0
        %268 = vmatpush1.xpose.msra.mxu0 0.0
        %269 = vmatprep.subr.mxu0 0.0
        %270 = vmatpush1.xpose.msra.mxu0 0.0
        %271 = vmatprep.subr.mxu0 0.0
        %272 = vmatpush1.xpose.msra.mxu0 0.0
        %273 = vmatprep.subr.mxu0 0.0
        %274 = vmatpush1.xpose.msra.mxu0 0.0
        %275 = vmatprep.subr.mxu0 0.0
        %276 = vmatpush1.xpose.msra.mxu0 0.0
        %277 = vmatprep.subr.mxu0 0.0
        %278 = vmatpush1.xpose.msra.mxu0 0.0
        %279 = vmatprep.subr.mxu0 0.0
        %280 = vmatpush1.xpose.msra.mxu0 0.0
        %281 = vmatprep.subr.mxu0 0.0
        %282 = vmatpush1.xpose.msra.mxu0 0.0
        %283 = vmatprep.subr.mxu0 0.0
        %284 = vmatpush1.xpose.msra.mxu0 0.0
        %285 = vmatprep.subr.mxu0 0.0
        %286 = vmatpush1.xpose.msra.mxu0 0.0
        %287 = vmatprep.mubr.f32.mxu0 0.0
        %288 = vmatmul.mubr.f32.gmra.mrb[0].mxu0 %v219
        %v289 = vpop.f32.mrb[0].mxu0
        %v290 = vadd.f32 0.0, %v289
        %v291 = vpop.f32.mrb[0].mxu0
        %292 = vdwg.mxu0
        %293 = vmatprep.subr.mxu0 0.0
        %294 = vmatpush1.xpose.msra.mxu0 %v220
        %295 = vmatprep.subr.mxu0 0.0
        %296 = vmatpush1.xpose.msra.mxu0 0.0
        %297 = vmatprep.subr.mxu0 0.0
        %298 = vmatpush1.xpose.msra.mxu0 0.0
        %299 = vmatprep.subr.mxu0 0.0
        %300 = vmatpush1.xpose.msra.mxu0 0.0
        %301 = vmatprep.subr.mxu0 0.0
        %302 = vmatpush1.xpose.msra.mxu0 0.0
        %303 = vmatprep.subr.mxu0 0.0
        %304 = vmatpush1.xpose.msra.mxu0 0.0
        %305 = vmatprep.subr.mxu0 0.0
        %306 = vmatpush1.xpose.msra.mxu0 0.0
        %307 = vmatprep.subr.mxu0 0.0
        %308 = vmatpush1.xpose.msra.mxu0 0.0
        %309 = vmatprep.subr.mxu0 0.0
        %310 = vmatpush1.xpose.msra.mxu0 0.0
        %311 = vmatprep.subr.mxu0 0.0
        %312 = vmatpush1.xpose.msra.mxu0 0.0
        %313 = vmatprep.subr.mxu0 0.0
        %314 = vmatpush1.xpose.msra.mxu0 0.0
        %315 = vmatprep.subr.mxu0 0.0
        %316 = vmatpush1.xpose.msra.mxu0 0.0
        %317 = vmatprep.subr.mxu0 0.0
        %318 = vmatpush1.xpose.msra.mxu0 0.0
        %319 = vmatprep.subr.mxu0 0.0
        %320 = vmatpush1.xpose.msra.mxu0 0.0
        %321 = vmatprep.subr.mxu0 0.0
        %322 = vmatpush1.xpose.msra.mxu0 0.0
        %323 = vmatprep.subr.mxu0 0.0
        %324 = vmatpush1.xpose.msra.mxu0 0.0
        %325 = vmatprep.subr.mxu0 0.0
        %326 = vmatpush1.xpose.msra.mxu0 0.0
        %327 = vmatprep.subr.mxu0 0.0
        %328 = vmatpush1.xpose.msra.mxu0 0.0
        %329 = vmatprep.subr.mxu0 0.0
        %330 = vmatpush1.xpose.msra.mxu0 0.0
        %331 = vmatprep.subr.mxu0 0.0
        %332 = vmatpush1.xpose.msra.mxu0 0.0
        %333 = vmatprep.subr.mxu0 0.0
        %334 = vmatpush1.xpose.msra.mxu0 0.0
        %335 = vmatprep.subr.mxu0 0.0
        %336 = vmatpush1.xpose.msra.mxu0 0.0
        %337 = vmatprep.subr.mxu0 0.0
        %338 = vmatpush1.xpose.msra.mxu0 0.0
        %339 = vmatprep.subr.mxu0 0.0
        %340 = vmatpush1.xpose.msra.mxu0 0.0
        %341 = vmatprep.subr.mxu0 0.0
        %342 = vmatpush1.xpose.msra.mxu0 0.0
        %343 = vmatprep.subr.mxu0 0.0
        %344 = vmatpush1.xpose.msra.mxu0 0.0
        %345 = vmatprep.subr.mxu0 0.0
        %346 = vmatpush1.xpose.msra.mxu0 0.0
        %347 = vmatprep.subr.mxu0 0.0
        %348 = vmatpush1.xpose.msra.mxu0 0.0
        %349 = vmatprep.subr.mxu0 0.0
        %350 = vmatpush1.xpose.msra.mxu0 0.0
        %351 = vmatprep.subr.mxu0 0.0
        %352 = vmatpush1.xpose.msra.mxu0 0.0
        %353 = vmatprep.subr.mxu0 0.0
        %354 = vmatpush1.xpose.msra.mxu0 0.0
        %355 = vmatprep.subr.mxu0 0.0
        %356 = vmatpush1.xpose.msra.mxu0 0.0
        %357 = vmatprep.mubr.f32.mxu0 0.0
        %358 = vmatmul.mubr.f32.gmra.mrb[0].mxu0 %v220
        %v359 = vpop.f32.mrb[0].mxu0
        %v360 = vadd.f32 0.0, %v359
        %v361 = vpop.f32.mrb[0].mxu0
        %362 = vdwg.mxu0
        %v363 = vadd.f32 %v221, %v290
        %v364 = vadd.f32 %v222, %v360
        %vm365 = vcmask 64512
        %366 = vst.msk [vmem:[#allocation2] sm:$0xff] %vm365, %v363
        %367 = vst.msk [vmem:[#allocation2 + $0x8] sm:$0xff] %vm365, %v364
        %p368 = scmp.eq.s32.totalorder %s24, 1
        // Predicated region
        $region45: #{tpu_custom_call.1} parent=31 // pred_check
          %p369 = pneg %p368
        $region46: #{tpu_custom_call.1} parent=31 // pred_check_branch
          %371 = sbr.rel (%p369) target = $region48
        $region47: #{tpu_custom_call.1} parent=31 // pred_region
          %v372 = vld [vmem:[#allocation2] sm:$0xff]
          %v373 = vld [vmem:[#allocation2 + $0x8] sm:$0xff]
          %v374 = vld [vmem:[#allocation6] sm:$0xff]
          %v376 = vsel %vm365, %v372, 0
          %378 = vmatprep.subr.mxu0 0.0
          %379 = vmatpush1.msra.mxu0 %v374
          %380 = vmatprep.subr.mxu0 0.0
          %381 = vmatpush1.msra.mxu0 0.0
          %382 = vmatprep.subr.mxu0 0.0
          %383 = vmatpush1.msra.mxu0 0.0
          %384 = vmatprep.subr.mxu0 0.0
          %385 = vmatpush1.msra.mxu0 0.0
          %386 = vmatprep.subr.mxu0 0.0
          %387 = vmatpush1.msra.mxu0 0.0
          %388 = vmatprep.subr.mxu0 0.0
          %389 = vmatpush1.msra.mxu0 0.0
          %390 = vmatprep.subr.mxu0 0.0
          %391 = vmatpush1.msra.mxu0 0.0
          %392 = vmatprep.subr.mxu0 0.0
          %393 = vmatpush1.msra.mxu0 0.0
          %394 = vmatprep.subr.mxu0 0.0
          %395 = vmatpush1.msra.mxu0 0.0
          %396 = vmatprep.subr.mxu0 0.0
          %397 = vmatpush1.msra.mxu0 0.0
          %398 = vmatprep.subr.mxu0 0.0
          %399 = vmatpush1.msra.mxu0 0.0
          %400 = vmatprep.subr.mxu0 0.0
          %401 = vmatpush1.msra.mxu0 0.0
          %402 = vmatprep.subr.mxu0 0.0
          %403 = vmatpush1.msra.mxu0 0.0
          %404 = vmatprep.subr.mxu0 0.0
          %405 = vmatpush1.msra.mxu0 0.0
          %406 = vmatprep.subr.mxu0 0.0
          %407 = vmatpush1.msra.mxu0 0.0
          %408 = vmatprep.subr.mxu0 0.0
          %409 = vmatpush1.msra.mxu0 0.0
          %410 = vmatprep.subr.mxu0 0.0
          %411 = vmatpush1.msra.mxu0 0.0
          %412 = vmatprep.subr.mxu0 0.0
          %413 = vmatpush1.msra.mxu0 0.0
          %414 = vmatprep.subr.mxu0 0.0
          %415 = vmatpush1.msra.mxu0 0.0
          %416 = vmatprep.subr.mxu0 0.0
          %417 = vmatpush1.msra.mxu0 0.0
          %418 = vmatprep.subr.mxu0 0.0
          %419 = vmatpush1.msra.mxu0 0.0
          %420 = vmatprep.subr.mxu0 0.0
          %421 = vmatpush1.msra.mxu0 0.0
          %422 = vmatprep.subr.mxu0 0.0
          %423 = vmatpush1.msra.mxu0 0.0
          %424 = vmatprep.subr.mxu0 0.0
          %425 = vmatpush1.msra.mxu0 0.0
          %426 = vmatprep.subr.mxu0 0.0
          %427 = vmatpush1.msra.mxu0 0.0
          %428 = vmatprep.subr.mxu0 0.0
          %429 = vmatpush1.msra.mxu0 0.0
          %430 = vmatprep.subr.mxu0 0.0
          %431 = vmatpush1.msra.mxu0 0.0
          %432 = vmatprep.subr.mxu0 0.0
          %433 = vmatpush1.msra.mxu0 0.0
          %434 = vmatprep.subr.mxu0 0.0
          %435 = vmatpush1.msra.mxu0 0.0
          %436 = vmatprep.subr.mxu0 0.0
          %437 = vmatpush1.msra.mxu0 0.0
          %438 = vmatprep.subr.mxu0 0.0
          %439 = vmatpush1.msra.mxu0 0.0
          %440 = vmatprep.subr.mxu0 0.0
          %441 = vmatpush1.msra.mxu0 0.0
          %442 = vmatprep.mubr.f32.mxu0 0.0
          %443 = vmatmul.mubr.f32.gmra.mrb[0].mxu0 %v376
          %v444 = vpop.f32.mrb[0].mxu0
          %v445 = vadd.f32 0.0, %v444
          %v446 = vpop.f32.mrb[0].mxu0
          %447 = vdwg.mxu0
          %v449 = vsel %vm365, %v373, 0
          %451 = vmatprep.subr.mxu0 0.0
          %452 = vmatpush1.msra.mxu0 %v374
          %453 = vmatprep.subr.mxu0 0.0
          %454 = vmatpush1.msra.mxu0 0.0
          %455 = vmatprep.subr.mxu0 0.0
          %456 = vmatpush1.msra.mxu0 0.0
          %457 = vmatprep.subr.mxu0 0.0
          %458 = vmatpush1.msra.mxu0 0.0
          %459 = vmatprep.subr.mxu0 0.0
          %460 = vmatpush1.msra.mxu0 0.0
          %461 = vmatprep.subr.mxu0 0.0
          %462 = vmatpush1.msra.mxu0 0.0
          %463 = vmatprep.subr.mxu0 0.0
          %464 = vmatpush1.msra.mxu0 0.0
          %465 = vmatprep.subr.mxu0 0.0
          %466 = vmatpush1.msra.mxu0 0.0
          %467 = vmatprep.subr.mxu0 0.0
          %468 = vmatpush1.msra.mxu0 0.0
          %469 = vmatprep.subr.mxu0 0.0
          %470 = vmatpush1.msra.mxu0 0.0
          %471 = vmatprep.subr.mxu0 0.0
          %472 = vmatpush1.msra.mxu0 0.0
          %473 = vmatprep.subr.mxu0 0.0
          %474 = vmatpush1.msra.mxu0 0.0
          %475 = vmatprep.subr.mxu0 0.0
          %476 = vmatpush1.msra.mxu0 0.0
          %477 = vmatprep.subr.mxu0 0.0
          %478 = vmatpush1.msra.mxu0 0.0
          %479 = vmatprep.subr.mxu0 0.0
          %480 = vmatpush1.msra.mxu0 0.0
          %481 = vmatprep.subr.mxu0 0.0
          %482 = vmatpush1.msra.mxu0 0.0
          %483 = vmatprep.subr.mxu0 0.0
          %484 = vmatpush1.msra.mxu0 0.0
          %485 = vmatprep.subr.mxu0 0.0
          %486 = vmatpush1.msra.mxu0 0.0
          %487 = vmatprep.subr.mxu0 0.0
          %488 = vmatpush1.msra.mxu0 0.0
          %489 = vmatprep.subr.mxu0 0.0
          %490 = vmatpush1.msra.mxu0 0.0
          %491 = vmatprep.subr.mxu0 0.0
          %492 = vmatpush1.msra.mxu0 0.0
          %493 = vmatprep.subr.mxu0 0.0
          %494 = vmatpush1.msra.mxu0 0.0
          %495 = vmatprep.subr.mxu0 0.0
          %496 = vmatpush1.msra.mxu0 0.0
          %497 = vmatprep.subr.mxu0 0.0
          %498 = vmatpush1.msra.mxu0 0.0
          %499 = vmatprep.subr.mxu0 0.0
          %500 = vmatpush1.msra.mxu0 0.0
          %501 = vmatprep.subr.mxu0 0.0
          %502 = vmatpush1.msra.mxu0 0.0
          %503 = vmatprep.subr.mxu0 0.0
          %504 = vmatpush1.msra.mxu0 0.0
          %505 = vmatprep.subr.mxu0 0.0
          %506 = vmatpush1.msra.mxu0 0.0
          %507 = vmatprep.subr.mxu0 0.0
          %508 = vmatpush1.msra.mxu0 0.0
          %509 = vmatprep.subr.mxu0 0.0
          %510 = vmatpush1.msra.mxu0 0.0
          %511 = vmatprep.subr.mxu0 0.0
          %512 = vmatpush1.msra.mxu0 0.0
          %513 = vmatprep.subr.mxu0 0.0
          %514 = vmatpush1.msra.mxu0 0.0
          %515 = vmatprep.mubr.f32.mxu0 0.0
          %516 = vmatmul.mubr.f32.gmra.mrb[0].mxu0 %v449
          %v517 = vpop.f32.mrb[0].mxu0
          %v518 = vadd.f32 0.0, %v517
          %v519 = vpop.f32.mrb[0].mxu0
          %520 = vdwg.mxu0
          %v521 = vmul.f32 %v445, %v374
          %v522 = vmul.f32 %v518, %v374
          %v523 = vsel %vm365, %v521, 0.0
          %v524 = vrot.slane %v523, 4
          %v525 = vadd.f32 %v523, %v524
          %v526 = vrot.slane %v525, 2
          %v527 = vadd.f32 %v525, %v526
          %v528 = vrot.slane %v527, 1
          %v529 = vadd.f32 %v527, %v528
          %v530 = vsel %vm365, %v522, 0.0
          %v531 = vrot.slane %v530, 4
          %v532 = vadd.f32 %v530, %v531
          %v533 = vrot.slane %v532, 2
          %v534 = vadd.f32 %v532, %v533
          %v535 = vrot.slane %v534, 1
          %v536 = vadd.f32 %v534, %v535
          %v537 = vld [vmem:[%s2] sm:$0x1]
          %v538 = vld [vmem:[%s2 + $0x1] sm:$0x1]
          %v539 = vlaneseq
          %v540 = vshrl.u32 %v539, 7
          %v541 = vsub.s32 0, %v540
          %v542 = vrot.slane %v537, %v541
          %v543 = vmul.f32 %v529, %v542
          %v544 = vmul.f32 %v536, %v542
          %v545 = vlaneseq
          %v546 = vshrl.u32 %v545, 7
          %v547 = vsub.s32 0, %v546
          %v548 = vrot.slane %v538, %v547
          %v549 = vadd.f32 %v543, %v548
          %v550 = vadd.f32 %v544, %v548
          %v553 = vrot.slane %v550, 7
          %vm554 = vcmask 1041409
          %v555 = vsel %vm554, %v553, %v549
          %vm557 = vcmask 58368
          %558 = vst.msk [vmem:[#allocation8] sm:$0x3] %vm557, %v555
        $region48: #{tpu_custom_call.1} parent=31 // pred_fallthru
          _
        // Predicated region
        $region49: #{tpu_custom_call.1} parent=31 // pred_check
          %p559 = pneg %p119
        $region50: #{tpu_custom_call.1} parent=31 // pred_check_branch
          %561 = sbr.rel (%p559) target = $region52
        $region51: #{tpu_custom_call.1} parent=31 // pred_region
          %s563 = ssub.s32 32, 32
          %564 = vsyncadd [#allocation5], %s563
          %s565 = smul.addr %s23, 32
          %s566 = scalar_lea.hbm %s3, %s565
          %s568 = sshll.u32 [#allocation8], 4
          %s569 = int_to_ptr.vmem [resolvable:$true] %s568
          %571 = dma.vmem_to_hbm [thread:$0]  %s569, 32, %s566, [#allocation5]
        $region52: #{tpu_custom_call.1} parent=31 // pred_fallthru
          _
        // Predicated region
        $region53: #{tpu_custom_call.1} parent=31 // pred_check
          %p572 = pneg %p119
        $region54: #{tpu_custom_call.1} parent=31 // pred_check_branch
          %574 = sbr.rel (%p572) target = $region56
        $region55: #{tpu_custom_call.1} parent=31 // pred_region
          %575 = dma.done [#allocation5], 32
        $region56: #{tpu_custom_call.1} parent=31 // pred_fallthru
          _
      $region32: #{tpu_custom_call.1} parent=5 // pred_fallthru
        _
      %p576 = scmp.le.s32.totalorder 2, %s14
      // Predicated region
      $region57: #{tpu_custom_call.1} parent=5 // pred_check
        %p577 = pneg %p576
      $region58: #{tpu_custom_call.1} parent=5 // pred_check_branch
        %579 = sbr.rel (%p577) target = $region60
      $region59: #{tpu_custom_call.1} parent=5 // pred_region
        %s580 = ssub.s32 %s14, 2
      $region60: #{tpu_custom_call.1} parent=5 // pred_fallthru
        _
    $region6: #{tpu_custom_call.1} parent=1 // loop_footer
      %s18 = sadd.s32 1, %s14
    $region7: #{tpu_custom_call.1} parent=1 // loop_footer_branch
      %13 = sbr.rel target = $region3
    $region8: #{tpu_custom_call.1} parent=1 // loop_exit
      _
    %581 = vsyncpa [#allocation4], 1
    %s582 = scalar_lea.sflag [#allocation4], 1
    %583 = vsyncpa %s582, 1
    %584 = vsyncpa [#allocation7], 1
    %585 = vsyncpa [#allocation5], 1
    %s586 = scalar_lea.sflag [#allocation5], 1
    %587 = vsyncpa %s586, 1

</llo_original>
